<compile_context>
chip_gen: v5e
topology: v5e:2x2
jax: 0.10.0
libtpu: 0.0.40
codegen_flags: <defaults>
</compile_context>

<pallas_src>
import functools

import jax
import jax.numpy as jnp
from jax.experimental import pallas as pl
from jax.experimental.pallas import tpu as pltpu

_LANE = 128


def _round_up(x: int, m: int) -> int:
    return ((x + m - 1) // m) * m


def _make_kernel(write_masked: bool):
    """Builds the per-batch-tile kernel.

    adj_ref    : [N, N, TB]  (src_node, dst_node, batch-on-lanes), input dtype
    mask_ref   : [N, N, 1]   batch-invariant resident mask, or [N, N, TB]
    masked_ref : [N, N, TB]  adj * mask in adj's dtype (only if write_masked)
    stats_ref  : [2, TB]     f32; row 0 = edge count, row 1 = DAG validity
    """

    def kernel(adj_ref, mask_ref, *out_refs):
        if write_masked:
            masked_ref, stats_ref = out_refs
        else:
            (stats_ref,) = out_refs

        n = adj_ref.shape[0]

        # Narrow HBM dtypes -> f32 vregs (safe on v5e which lacks bf16 VALU).
        adj = adj_ref[...].astype(jnp.float32)
        m = mask_ref[...]
        mask = (jnp.where(m, 1.0, 0.0) if m.dtype == jnp.bool_
                else m.astype(jnp.float32))

        # Elementwise mask on the VPU.  A shared [N, N, 1] mask lane-broadcasts.
        masked = adj * mask
        if write_masked:
            masked_ref[...] = masked.astype(masked_ref.dtype)

        # Degrees: axis 0 = source node (plane adds on the VALU),
        #          axis 1 = destination node (sublane reduce on the XLU).
        in_deg = jnp.sum(masked, axis=0)     # [N, TB]  per destination node
        out_deg = jnp.sum(masked, axis=1)    # [N, TB]  per source node

        # Total edge (weight) count per sample.
        count = jnp.sum(in_deg, axis=0, keepdims=True)          # [1, TB]

        # Validity: every node except the input (node 0) has an incoming edge
        # and every node except the output (node N-1) has an outgoing edge.
        # Full-width iota+where exemptions keep lanes dense and make N == 1
        # well defined (everything exempt -> valid).
        node = jax.lax.broadcasted_iota(jnp.int32, in_deg.shape, 0)
        ok_in = jnp.where(jnp.logical_or(node == 0, in_deg > 0.0), 1.0, 0.0)
        ok_out = jnp.where(jnp.logical_or(node == n - 1, out_deg > 0.0), 1.0, 0.0)
        valid = jnp.min(ok_in * ok_out, axis=0, keepdims=True)  # [1, TB]

        # Single lane-dense full-block store of the stats slab.
        stats_ref[...] = jnp.concatenate([count, valid], axis=0)

    return kernel


@functools.partial(jax.jit,
                   static_argnames=("batch_tile", "return_masked", "batch_last"),
                   donate_argnums=(0,))
def sampling_arch_metrics(adj, mask, *, batch_tile: int = 4096,
                          return_masked: bool = True, batch_last: bool = True):
    """Masked adjacency + per-sample graph statistics.

    adj  : [N, N, B] (batch_last=True, fast path) or [B, N, N] (slow compat path).
    mask : [N, N] batch-invariant, or the same layout/shape as adj.
    Returns (masked_adj in adj's layout & dtype, or None;
             edge_counts [B] f32; validity [B] f32).

    Note: for soft/real-valued adjacencies edge_counts is summed edge weight and
    validity uses `degree > 0`, matching adj*mask semantics rather than the
    discrete/argmax semantics of the original PyTorch pipeline.
    """
    if not batch_last:                              # compatibility path only
        adj = jnp.transpose(adj, (1, 2, 0))
        if mask.ndim == 3:
            mask = jnp.transpose(mask, (1, 2, 0))
    N, _, B = adj.shape

    shared_mask = mask.ndim == 2
    if shared_mask:
        mask = mask[:, :, None]                     # [N, N, 1], stays resident

    # Lane-aligned batch tile; capped at ceil(B/2) so the grid has >= 2 steps
    # and both v7x TensorCores get work.  Per-step VMEM (double-buffered
    # blocks + a few f32 intermediates of the block) stays far below every
    # generation's scoped budget at N ~ 8.
    tb = max(_LANE, min(_round_up(batch_tile, _LANE),
                        _round_up(pl.cdiv(B, 2), _LANE)))
    grid = (pl.cdiv(B, tb),)

    adj_spec = pl.BlockSpec((N, N, tb), lambda b: (0, 0, b))
    mask_spec = (pl.BlockSpec((N, N, 1), lambda b: (0, 0, 0)) if shared_mask
                 else pl.BlockSpec((N, N, tb), lambda b: (0, 0, b)))
    stats_spec = pl.BlockSpec((2, tb), lambda b: (0, b))

    if return_masked:
        out_shape = (jax.ShapeDtypeStruct((N, N, B), adj.dtype),
                     jax.ShapeDtypeStruct((2, B), jnp.float32))
        out_specs = (adj_spec, stats_spec)
        io_aliases = {0: 0}      # masked adjacency overwrites the donated adj
    else:
        out_shape = jax.ShapeDtypeStruct((2, B), jnp.float32)
        out_specs = stats_spec
        io_aliases = {}

    result = pl.pallas_call(
        _make_kernel(return_masked),
        out_shape=out_shape,
        grid=grid,
        in_specs=[adj_spec, mask_spec],
        out_specs=out_specs,
        input_output_aliases=io_aliases,
        compiler_params=pltpu.CompilerParams(
            dimension_semantics=("parallel",),       # dual-TC sharding on v7x
            vmem_limit_bytes=32 * 1024 * 1024),
    )(adj, mask)

    if return_masked:
        masked, stats = result
        if not batch_last:
            masked = jnp.transpose(masked, (2, 0, 1))
    else:
        masked, stats = None, result
    return masked, stats[0, :], stats[1, :]


if __name__ == "__main__":
    key = jax.random.PRNGKey(0)
    # Batch many sampled architectures per call (tiny batches are pure launch
    # overhead); N = 8 nodes per cell as in NAS-Bench-style search spaces.
    B, N = 1000, 8

    # Sampled binarized adjacency produced directly in the batch-on-lanes
    # [N, N, B] layout, kept narrow (bf16) in HBM.
    adj = (jax.random.uniform(key, (N, N, B)) > 0.5).astype(jnp.bfloat16)
    adj_dtype = adj.dtype
    # Batch-invariant DAG mask (only strictly-upper-triangular edges legal),
    # passed once as [N, N]; the kernel keeps it resident instead of streaming
    # B broadcast copies.
    mask = jnp.triu(jnp.ones((N, N), jnp.float32), k=1)

    # Plain-JAX reference, computed BEFORE the kernel call (adj is donated and
    # its HBM buffer is reused for the masked-adjacency output).
    ref_masked_f32 = adj.astype(jnp.float32) * mask[:, :, None]
    ref_counts = jnp.sum(ref_masked_f32, axis=(0, 1))
    in_deg = jnp.sum(ref_masked_f32, axis=0)     # [N, B] per destination node
    out_deg = jnp.sum(ref_masked_f32, axis=1)    # [N, B] per source node
    ref_valid = jnp.logical_and(
        jnp.all(in_deg[1:, :] > 0.0, axis=0),
        jnp.all(out_deg[:-1, :] > 0.0, axis=0)).astype(jnp.float32)
    ref_masked = ref_masked_f32.astype(adj_dtype)
    jax.block_until_ready((ref_masked, ref_counts, ref_valid))

    masked_adj, edge_counts, validity = sampling_arch_metrics(
        adj, mask, batch_tile=4096)   # tb capped to 512 -> grid=(2,)
    jax.block_until_ready((masked_adj, edge_counts, validity))

    assert masked_adj.dtype == adj_dtype
    assert masked_adj.shape == (N, N, B)
    assert jnp.array_equal(masked_adj, ref_masked)
    assert jnp.array_equal(edge_counts, ref_counts)
    assert jnp.array_equal(validity, ref_valid)

    # TODO(synk): arch-string decoding, uniqueness/novelty lookup against the
    # training set, property-dict (test_acc/FLOPs/params/latency) retrieval and
    # text-file writing have no tensor/Pallas equivalent and are intentionally
    # not implemented.

    print("KERNEL_OK")
</pallas_src>

<mosaic_0001>
module attributes {stable_mosaic.version = 11 : i64} {
  func.func @kernel(%arg0: i32, %arg1: memref<8x8x512xbf16, #tpu.memory_space<vmem>>, %arg2: memref<8x8x1xf32, #tpu.memory_space<vmem>>, %arg3: memref<8x8x512xbf16, #tpu.memory_space<vmem>>, %arg4: memref<2x512xf32, #tpu.memory_space<vmem>>) attributes {dimension_semantics = [#tpu.dimension_semantics<parallel>], iteration_bounds = array<i64: 2>, scalar_prefetch = 0 : i64, scratch_operands = 0 : i64, tpu.core_type = #tpu.core_type<tc>, window_params = [{transform_indices = @transform_0, window_bounds = array<i64: 8, 8, 512>}, {pipeline_mode = #tpu.pipeline_mode<synchronous>, transform_indices = @transform_1, window_bounds = array<i64: 8, 8, 1>}, {transform_indices = @transform_2, window_bounds = array<i64: 8, 8, 512>}, {transform_indices = @transform_3, window_bounds = array<i64: 2, 512>}]} {
    %c0 = arith.constant 0 : index
    %c0_0 = arith.constant 0 : index
    %c0_1 = arith.constant 0 : index
    %0 = vector.load %arg1[%c0, %c0_0, %c0_1] : memref<8x8x512xbf16, #tpu.memory_space<vmem>>, vector<8x8x512xbf16>
    %1 = arith.extf %0 : vector<8x8x512xbf16> to vector<8x8x512xf32>
    %c0_2 = arith.constant 0 : index
    %c0_3 = arith.constant 0 : index
    %c0_4 = arith.constant 0 : index
    %2 = vector.load %arg2[%c0_2, %c0_3, %c0_4] : memref<8x8x1xf32, #tpu.memory_space<vmem>>, vector<8x8x1xf32>
    %3 = vector.broadcast %2 : vector<8x8x1xf32> to vector<8x8x512xf32>
    %4 = arith.mulf %1, %3 : vector<8x8x512xf32>
    %5 = arith.truncf %4 : vector<8x8x512xf32> to vector<8x8x512xbf16>
    %c0_5 = arith.constant 0 : index
    %c0_6 = arith.constant 0 : index
    %c0_7 = arith.constant 0 : index
    %6 = vector.load %arg3[%c0_5, %c0_6, %c0_7] : memref<8x8x512xbf16, #tpu.memory_space<vmem>>, vector<8x8x512xbf16>
    tpu.vector_store %arg3[%c0_5, %c0_6, %c0_7], %5 {strides = array<i32>} : memref<8x8x512xbf16, #tpu.memory_space<vmem>>, vector<8x8x512xbf16>,
    %cst = arith.constant dense<0.000000e+00> : vector<8x512xf32>
    %7 = vector.multi_reduction <add>, %4, %cst [0] : vector<8x8x512xf32> to vector<8x512xf32>
    %cst_8 = arith.constant dense<0.000000e+00> : vector<8x512xf32>
    %8 = vector.multi_reduction <add>, %4, %cst_8 [1] : vector<8x8x512xf32> to vector<8x512xf32>
    %cst_9 = arith.constant dense<0.000000e+00> : vector<512xf32>
    %9 = vector.multi_reduction <add>, %7, %cst_9 [0] : vector<8x512xf32> to vector<512xf32>
    %10 = vector.shape_cast %9 : vector<512xf32> to vector<1x512xf32>
    %11 = tpu.iota {dimensions = array<i32: 0>} : vector<8x512xi32>
    %c0_i32 = arith.constant 0 : i32
    %12 = vector.broadcast %c0_i32 : i32 to vector<8x512xi32>
    %13 = arith.cmpi eq, %11, %12 : vector<8x512xi32>
    %cst_10 = arith.constant 0.000000e+00 : f32
    %14 = vector.broadcast %cst_10 : f32 to vector<8x512xf32>
    %15 = arith.cmpf ogt, %7, %14 : vector<8x512xf32>
    %16 = arith.ori %13, %15 : vector<8x512xi1>
    %cst_11 = arith.constant 1.000000e+00 : f32
    %cst_12 = arith.constant 0.000000e+00 : f32
    %17 = vector.broadcast %cst_11 : f32 to vector<8x512xf32>
    %18 = vector.broadcast %cst_12 : f32 to vector<8x512xf32>
    %19 = arith.select %16, %17, %18 : vector<8x512xi1>, vector<8x512xf32>
    %c7_i32 = arith.constant 7 : i32
    %20 = vector.broadcast %c7_i32 : i32 to vector<8x512xi32>
    %21 = arith.cmpi eq, %11, %20 : vector<8x512xi32>
    %cst_13 = arith.constant 0.000000e+00 : f32
    %22 = vector.broadcast %cst_13 : f32 to vector<8x512xf32>
    %23 = arith.cmpf ogt, %8, %22 : vector<8x512xf32>
    %24 = arith.ori %21, %23 : vector<8x512xi1>
    %cst_14 = arith.constant 1.000000e+00 : f32
    %cst_15 = arith.constant 0.000000e+00 : f32
    %25 = vector.broadcast %cst_14 : f32 to vector<8x512xf32>
    %26 = vector.broadcast %cst_15 : f32 to vector<8x512xf32>
    %27 = arith.select %24, %25, %26 : vector<8x512xi1>, vector<8x512xf32>
    %28 = arith.mulf %19, %27 : vector<8x512xf32>
    %cst_16 = arith.constant dense<0x7F800000> : vector<512xf32>
    %29 = vector.multi_reduction <minimumf>, %28, %cst_16 [0] : vector<8x512xf32> to vector<512xf32>
    %30 = vector.shape_cast %29 : vector<512xf32> to vector<1x512xf32>
    %31 = tpu.concatenate %10, %30 in 0 : vector<1x512xf32>, vector<1x512xf32> -> vector<2x512xf32>
    %c0_17 = arith.constant 0 : index
    %c0_18 = arith.constant 0 : index
    %32 = vector.load %arg4[%c0_17, %c0_18] : memref<2x512xf32, #tpu.memory_space<vmem>>, vector<2x512xf32>
    tpu.vector_store %arg4[%c0_17, %c0_18], %31 {strides = array<i32>} : memref<2x512xf32, #tpu.memory_space<vmem>>, vector<2x512xf32>,
    return
  }
  func.func @transform_0(%arg0: i32) -> (i32, i32, i32) {
    %c0_i32 = arith.constant 0 : i32
    %c0_i32_0 = arith.constant 0 : i32
    %c0_i32_1 = arith.constant 0 : i32
    return %c0_i32, %c0_i32_0, %arg0 : i32, i32, i32
  }
  func.func @transform_1(%arg0: i32) -> (i32, i32, i32) {
    %c0_i32 = arith.constant 0 : i32
    %c0_i32_0 = arith.constant 0 : i32
    %c0_i32_1 = arith.constant 0 : i32
    %c0_i32_2 = arith.constant 0 : i32
    return %c0_i32, %c0_i32_0, %c0_i32_1 : i32, i32, i32
  }
  func.func @transform_2(%arg0: i32) -> (i32, i32, i32) {
    %c0_i32 = arith.constant 0 : i32
    %c0_i32_0 = arith.constant 0 : i32
    %c0_i32_1 = arith.constant 0 : i32
    return %c0_i32, %c0_i32_0, %arg0 : i32, i32, i32
  }
  func.func @transform_3(%arg0: i32) -> (i32, i32) {
    %c0_i32 = arith.constant 0 : i32
    %c0_i32_0 = arith.constant 0 : i32
    return %c0_i32, %arg0 : i32, i32
  }
}

</mosaic_0001>

<llo_original>
// kernel: sampling_arch_metrics.1
$region0: #{sampling_arch_metrics.1}
  #allocation0 [shape = 'u32[]', space=smem, size = 0x4, offset = 0x4, fixed_abs, tag = 'smem constant byte address 0x4 - core index']
  #allocation1 [shape = 'u32[72,128]{1,0:T(1,128)}', space=vmem, size = 0x9000, scoped, tag = 'internal scratch']
  %s0 = inlined_call_operand.hbm [shape: bf16[8,8,1000], index: 0, kind: input, shape index: {}, may-alias: {0,2}]
  %s1 = inlined_call_operand.vmem [shape: f32[8,8,1], index: 1, kind: input, shape index: {}]
  %s2 = inlined_call_operand.hbm [shape: bf16[8,8,1000], index: 2, kind: output, shape index: {0}, may-alias: {0,2}]
  %s3 = inlined_call_operand.vmem [shape: f32[2,1000], index: 3, kind: output, shape index: {1}]
  %4 = xla_tuple %s2, %s3
  %s5 = sld [smem:[#allocation0]]
  $region53: #{sampling_arch_metrics.1} parent=0
    _
  %s7 = ssub.s32 1, %s5
  %s8 = scalar_select 0, %s7, %s5
  $region1: #{sampling_arch_metrics.1} parent=0
    #allocation2 [shape = 'u8[131072]{0}', space=vmem, size = 0x20000, scoped, tag = 'input window, operand 0']
    #allocation3 [shape = 's32[2]{0}', space=sflag, size = 0x8, scoped, tag = 'scoped memory for sampling_arch_metrics.1']
    #allocation4 [shape = 's32[2]{0}', space=sflag, size = 0x8, scoped, tag = 'scoped memory for sampling_arch_metrics.1']
    #allocation5 [shape = 'u8[131072]{0}', space=vmem, size = 0x20000, scoped, tag = 'output window, operand 0']
    %9 = vsyncpa [#allocation3], 0
    %s10 = scalar_lea.sflag [#allocation3], 1
    %11 = vsyncpa %s10, 0
    %12 = vsyncpa [#allocation4], 0
    %s13 = scalar_lea.sflag [#allocation4], 1
    %14 = vsyncpa %s13, 0
    loop: start=0, step=1, limit=4
    $region2: #{sampling_arch_metrics.1} parent=1 // loop_pre_header
      _
    $region3: #{sampling_arch_metrics.1} parent=1 // loop_header
      %s16 = sphi 0, %s20
      %p17 = scmp.ge.s32.totalorder %s16, 4
      %s26 = sphi 0, %s28
      %s29 = sphi 0, %s26
      %s30 = sphi 0, %s29
      %s46 = sphi 0, %s30
      %s50 = sphi 0, %s50
      %s52 = sphi 0, %s50
      %s53 = sphi 0, %s52
      %s67 = sphi 0, %s53
      %s73 = sphi 0, %s75
      %s76 = sphi 0, %s73
      %s77 = sphi 0, %s76
      %s93 = sphi 0, %s77
      %s99 = sphi 0, %s101
      %s102 = sphi 0, %s99
      %s103 = sphi 0, %s102
      %s119 = sphi 0, %s103
    $region4: #{sampling_arch_metrics.1} parent=1 // loop_header_branch
      %19 = sbr.rel (%p17) target = $region8
    $region5: #{sampling_arch_metrics.1} parent=1 // loop_body
      %s21 = ssub.s32 %s16, 1
      %s22 = ssub.s32 %s16, 2
      %s23 = sadd.s32 %s16, 1
      %s24 = ssub.s32 %s16, %s23
      %p25 = scmp.eq.s32.totalorder %s24, 0
      %s27 = sadd.s32 %s26, 1
      %s28 = scalar_select %p25, %s26, %s27
      %p31 = pneg %p25
      %p32 = scmp.eq.s32.totalorder %s16, 1
      %p33 = por %p31, %p32
      %p34 = scmp.ne.s32.totalorder %s26, %s29
      %p35 = scmp.eq.s32.totalorder %s16, 0
      %p36 = por %p34, %p35
      %p37 = scmp.ne.s32.totalorder %s26, %s29
      %p38 = scmp.eq.s32.totalorder %s21, 1
      %p39 = por %p37, %p38
      %p40 = scmp.ne.s32.totalorder %s29, %s30
      %p41 = scmp.eq.s32.totalorder %s21, 0
      %p42 = por %p40, %p41
      %p43 = scmp.ne.s32.totalorder %s29, %s30
      %p44 = scmp.eq.s32.totalorder %s22, 1
      %p45 = por %p43, %p44
      %p47 = scmp.ne.s32.totalorder %s30, %s46
      %p48 = scmp.eq.s32.totalorder %s22, 0
      %p49 = por %p47, %p48
      %s51 = sadd.s32 %s50, 1
      %p54 = scmp.eq.s32.totalorder %s16, 1
      %p55 = scmp.ne.s32.totalorder %s50, %s52
      %p56 = scmp.eq.s32.totalorder %s16, 0
      %p57 = por %p55, %p56
      %p58 = scmp.ne.s32.totalorder %s50, %s52
      %p59 = scmp.eq.s32.totalorder %s21, 1
      %p60 = por %p58, %p59
      %p61 = scmp.ne.s32.totalorder %s52, %s53
      %p62 = scmp.eq.s32.totalorder %s21, 0
      %p63 = por %p61, %p62
      %p64 = scmp.ne.s32.totalorder %s52, %s53
      %p65 = scmp.eq.s32.totalorder %s22, 1
      %p66 = por %p64, %p65
      %p68 = scmp.ne.s32.totalorder %s53, %s67
      %p69 = scmp.eq.s32.totalorder %s22, 0
      %p70 = por %p68, %p69
      %s71 = ssub.s32 %s16, %s23
      %p72 = scmp.eq.s32.totalorder %s71, 0
      %s74 = sadd.s32 %s73, 1
      %s75 = scalar_select %p72, %s73, %s74
      %p78 = pneg %p72
      %p79 = scmp.eq.s32.totalorder %s16, 1
      %p80 = por %p78, %p79
      %p81 = scmp.ne.s32.totalorder %s73, %s76
      %p82 = scmp.eq.s32.totalorder %s16, 0
      %p83 = por %p81, %p82
      %p84 = scmp.ne.s32.totalorder %s73, %s76
      %p85 = scmp.eq.s32.totalorder %s21, 1
      %p86 = por %p84, %p85
      %p87 = scmp.ne.s32.totalorder %s76, %s77
      %p88 = scmp.eq.s32.totalorder %s21, 0
      %p89 = por %p87, %p88
      %p90 = scmp.ne.s32.totalorder %s76, %s77
      %p91 = scmp.eq.s32.totalorder %s22, 1
      %p92 = por %p90, %p91
      %p94 = scmp.ne.s32.totalorder %s77, %s93
      %p95 = scmp.eq.s32.totalorder %s22, 0
      %p96 = por %p94, %p95
      %s97 = ssub.s32 %s16, %s23
      %p98 = scmp.eq.s32.totalorder %s97, 0
      %s100 = sadd.s32 %s99, 1
      %s101 = scalar_select %p98, %s99, %s100
      %p104 = pneg %p98
      %p105 = scmp.eq.s32.totalorder %s16, 1
      %p106 = por %p104, %p105
      %p107 = scmp.ne.s32.totalorder %s99, %s102
      %p108 = scmp.eq.s32.totalorder %s16, 0
      %p109 = por %p107, %p108
      %p110 = scmp.ne.s32.totalorder %s99, %s102
      %p111 = scmp.eq.s32.totalorder %s21, 1
      %p112 = por %p110, %p111
      %p113 = scmp.ne.s32.totalorder %s102, %s103
      %p114 = scmp.eq.s32.totalorder %s21, 0
      %p115 = por %p113, %p114
      %p116 = scmp.ne.s32.totalorder %s102, %s103
      %p117 = scmp.eq.s32.totalorder %s22, 1
      %p118 = por %p116, %p117
      %p120 = scmp.ne.s32.totalorder %s103, %s119
      %p121 = scmp.eq.s32.totalorder %s22, 0
      %p122 = por %p120, %p121
      %p123 = scmp.le.s32.totalorder 1, %s16
      %p124 = scmp.lt.s32.totalorder %s16, 3
      %p125 = pnand %p123, %p124
      %p126 = pneg %p125
      // Predicated region
      $region9: #{sampling_arch_metrics.1} parent=5 // pred_check
        _
      $region10: #{sampling_arch_metrics.1} parent=5 // pred_check_branch
        %128 = sbr.rel (%p125) target = $region12
      $region11: #{sampling_arch_metrics.1} parent=5 // pred_region
        %s129 = ssub.s32 %s16, 1
        // Predicated region
        $region13: #{sampling_arch_metrics.1} parent=11 // pred_check
          %p130 = pneg %p63
        $region14: #{sampling_arch_metrics.1} parent=11 // pred_check_branch
          %132 = sbr.rel (%p130) target = $region16
        $region15: #{sampling_arch_metrics.1} parent=11 // pred_region
          _
        $region16: #{sampling_arch_metrics.1} parent=11 // pred_fallthru
          _
      $region12: #{sampling_arch_metrics.1} parent=5 // pred_fallthru
        _
      %p133 = scmp.lt.s32.totalorder %s16, 2
      // Predicated region
      $region17: #{sampling_arch_metrics.1} parent=5 // pred_check
        %p134 = pneg %p133
      $region18: #{sampling_arch_metrics.1} parent=5 // pred_check_branch
        %136 = sbr.rel (%p134) target = $region20
      $region19: #{sampling_arch_metrics.1} parent=5 // pred_region
        // Predicated region
        $region21: #{sampling_arch_metrics.1} parent=19 // pred_check
          %p137 = pneg %p36
        $region22: #{sampling_arch_metrics.1} parent=19 // pred_check_branch
          %139 = sbr.rel (%p137) target = $region24
        $region23: #{sampling_arch_metrics.1} parent=19 // pred_region
          %s140 = sand.u32 %s26, 1
          %s141 = scalar_lea.sflag [#allocation3], %s140
          %s142 = sand.u32 %s26, 1
          %s143 = smul.addr %s142, 128
          %s144 = scalar_lea.vmem [#allocation2], %s143
          %s145 = smul.u32 4, %s16
          %147 = vsyncadd %s141, 0
          %s148 = smul.addr %s145, 4
          %s149 = scalar_lea.hbm %s0, %s148
          %s150 = sshll.u32 %s149, 4
          %s151 = int_to_ptr.hbm [resolvable:$true] %s150
          %s152 = sshll.u32 %s144, 4
          %s153 = int_to_ptr.vmem [resolvable:$true] %s152
          %158 = dma.hbm_to_vmem [thread:$0]  %s151, 2048, %s153, %s141, 512, 256, 16
        $region24: #{sampling_arch_metrics.1} parent=19 // pred_fallthru
          _
      $region20: #{sampling_arch_metrics.1} parent=5 // pred_fallthru
        _
      %p159 = scmp.le.s32.totalorder 1, %s16
      %p160 = scmp.lt.s32.totalorder %s16, 3
      %p161 = pnand %p159, %p160
      %p162 = pneg %p161
      // Predicated region
      $region25: #{sampling_arch_metrics.1} parent=5 // pred_check
        _
      $region26: #{sampling_arch_metrics.1} parent=5 // pred_check_branch
        %164 = sbr.rel (%p161) target = $region28
      $region27: #{sampling_arch_metrics.1} parent=5 // pred_region
        %s165 = ssub.s32 %s16, 1
        %s166 = sand.u32 %s29, 1
        %s167 = scalar_lea.sflag [#allocation3], %s166
        %s168 = sand.u32 %s29, 1
        %s169 = smul.addr %s168, 128
        %s170 = scalar_lea.vmem [#allocation2], %s169
        // Predicated region
        $region29: #{sampling_arch_metrics.1} parent=27 // pred_check
          %p171 = pneg %p42
        $region30: #{sampling_arch_metrics.1} parent=27 // pred_check_branch
          %173 = sbr.rel (%p171) target = $region32
        $region31: #{sampling_arch_metrics.1} parent=27 // pred_region
          %175 = dma.done %s167, 2048
        $region32: #{sampling_arch_metrics.1} parent=27 // pred_fallthru
          _
        %s176 = sand.u32 %s29, 1
        %s177 = scalar_lea.sflag [#allocation3], %s176
        %s178 = sand.u32 %s29, 1
        %s179 = smul.addr %s178, 128
        %s180 = scalar_lea.vmem [#allocation2], %s179
        %p181 = pneg %p42
        %p182 = pneg %p39
        %p183 = pneg %p63
        %p184 = pneg %p60
        %p185 = pneg %p89
        %p186 = pneg %p86
        %s187 = sand.u32 %s76, 1
        %s188 = scalar_lea.sflag [#allocation4], %s187
        %s189 = sand.u32 %s76, 1
        %s190 = smul.addr %s189, 128
        %s191 = scalar_lea.vmem [#allocation5], %s190
        %p192 = pneg %p115
        %p193 = pneg %p112
        %s194 = smul.u32 4, %s21
        %p195 = scmp.lt.s32.totalorder %s194, 7
        %s196 = scalar_select %p195, %s194, 7
        %s197 = smul.addr %s196, 2
        %s198 = scalar_lea.vmem %s3, %s197
        %s199 = smul.u32 4, %s21
        %s200 = smul.u32 4, %s21
        %s201 = smul.u32 4, %s21
        %p202 = scmp.lt.s32.totalorder %s201, 7
        %s203 = scalar_select %p202, %s201, 7
        %s204 = smul.addr %s203, 2
        %s205 = scalar_lea.vmem %s3, %s204
        %s206 = smul.u32 4, %s21
        %v207 = vld [vmem:[%s170] sm:$0xff]
        %v208 = vld [vmem:[%s170 + $0x8] sm:$0xff]
        %v209 = vld [vmem:[%s170 + $0x10] sm:$0xff]
        %v210 = vld [vmem:[%s170 + $0x18] sm:$0xff]
        %v211 = vld [vmem:[%s170 + $0x20] sm:$0xff]
        %v212 = vld [vmem:[%s170 + $0x28] sm:$0xff]
        %v213 = vld [vmem:[%s170 + $0x30] sm:$0xff]
        %v214 = vld [vmem:[%s170 + $0x38] sm:$0xff]
        %v215 = vld [vmem:[%s170 + $0x40] sm:$0xff]
        %v216 = vld [vmem:[%s170 + $0x48] sm:$0xff]
        %v217 = vld [vmem:[%s170 + $0x50] sm:$0xff]
        %v218 = vld [vmem:[%s170 + $0x58] sm:$0xff]
        %v219 = vld [vmem:[%s170 + $0x60] sm:$0xff]
        %v220 = vld [vmem:[%s170 + $0x68] sm:$0xff]
        %v221 = vld [vmem:[%s170 + $0x70] sm:$0xff]
        %v222 = vld [vmem:[%s170 + $0x78] sm:$0xff]
        %v223 = vunpack.c.l.bf16 %v207
        %v224 = vunpack.c.h.bf16 %v207
        %v225 = vunpack.c.l.bf16 %v208
        %v226 = vunpack.c.h.bf16 %v208
        %v227 = vunpack.c.l.bf16 %v209
        %v228 = vunpack.c.h.bf16 %v209
        %v229 = vunpack.c.l.bf16 %v210
        %v230 = vunpack.c.h.bf16 %v210
        %v231 = vunpack.c.l.bf16 %v211
        %v232 = vunpack.c.h.bf16 %v211
        %v233 = vunpack.c.l.bf16 %v212
        %v234 = vunpack.c.h.bf16 %v212
        %v235 = vunpack.c.l.bf16 %v213
        %v236 = vunpack.c.h.bf16 %v213
        %v237 = vunpack.c.l.bf16 %v214
        %v238 = vunpack.c.h.bf16 %v214
        %v239 = vunpack.c.l.bf16 %v215
        %v240 = vunpack.c.h.bf16 %v215
        %v241 = vunpack.c.l.bf16 %v216
        %v242 = vunpack.c.h.bf16 %v216
        %v243 = vunpack.c.l.bf16 %v217
        %v244 = vunpack.c.h.bf16 %v217
        %v245 = vunpack.c.l.bf16 %v218
        %v246 = vunpack.c.h.bf16 %v218
        %v247 = vunpack.c.l.bf16 %v219
        %v248 = vunpack.c.h.bf16 %v219
        %v249 = vunpack.c.l.bf16 %v220
        %v250 = vunpack.c.h.bf16 %v220
        %v251 = vunpack.c.l.bf16 %v221
        %v252 = vunpack.c.h.bf16 %v221
        %v253 = vunpack.c.l.bf16 %v222
        %v254 = vunpack.c.h.bf16 %v222
        %v255 = vld [vmem:[%s1] sm:$0xff]
        %v256 = vld [vmem:[%s1 + $0x8] sm:$0xff]
        %v257 = vld [vmem:[%s1 + $0x10] sm:$0xff]
        %v258 = vld [vmem:[%s1 + $0x18] sm:$0xff]
        %v259 = vld [vmem:[%s1 + $0x20] sm:$0xff]
        %v260 = vld [vmem:[%s1 + $0x28] sm:$0xff]
        %v261 = vld [vmem:[%s1 + $0x30] sm:$0xff]
        %v262 = vld [vmem:[%s1 + $0x38] sm:$0xff]
        %264 = vset.pattern.permute.xlu0 0
        %265 = vperm.xlu0 %264, %v255
        %v266 = vpop.permute.xlu0 %265
        %269 = vset.pattern.permute.xlu0 0
        %270 = vperm.xlu0 %269, %v256
        %v271 = vpop.permute.xlu0 %270
        %274 = vset.pattern.permute.xlu0 0
        %275 = vperm.xlu0 %274, %v257
        %v276 = vpop.permute.xlu0 %275
        %279 = vset.pattern.permute.xlu0 0
        %280 = vperm.xlu0 %279, %v258
        %v281 = vpop.permute.xlu0 %280
        %284 = vset.pattern.permute.xlu0 0
        %285 = vperm.xlu0 %284, %v259
        %v286 = vpop.permute.xlu0 %285
        %289 = vset.pattern.permute.xlu0 0
        %290 = vperm.xlu0 %289, %v260
        %v291 = vpop.permute.xlu0 %290
        %294 = vset.pattern.permute.xlu0 0
        %295 = vperm.xlu0 %294, %v261
        %v296 = vpop.permute.xlu0 %295
        %299 = vset.pattern.permute.xlu0 0
        %300 = vperm.xlu0 %299, %v262
        %v301 = vpop.permute.xlu0 %300
        %v303 = vmul.f32 %v223, %v266
        %v304 = vmul.f32 %v224, %v266
        %v305 = vmul.f32 %v225, %v266
        %v306 = vmul.f32 %v226, %v266
        %v307 = vmul.f32 %v227, %v271
        %v308 = vmul.f32 %v228, %v271
        %v309 = vmul.f32 %v229, %v271
        %v310 = vmul.f32 %v230, %v271
        %v311 = vmul.f32 %v231, %v276
        %v312 = vmul.f32 %v232, %v276
        %v313 = vmul.f32 %v233, %v276
        %v314 = vmul.f32 %v234, %v276
        %v315 = vmul.f32 %v235, %v281
        %v316 = vmul.f32 %v236, %v281
        %v317 = vmul.f32 %v237, %v281
        %v318 = vmul.f32 %v238, %v281
        %v319 = vmul.f32 %v239, %v286
        %v320 = vmul.f32 %v240, %v286
        %v321 = vmul.f32 %v241, %v286
        %v322 = vmul.f32 %v242, %v286
        %v323 = vmul.f32 %v243, %v291
        %v324 = vmul.f32 %v244, %v291
        %v325 = vmul.f32 %v245, %v291
        %v326 = vmul.f32 %v246, %v291
        %v327 = vmul.f32 %v247, %v296
        %v328 = vmul.f32 %v248, %v296
        %v329 = vmul.f32 %v249, %v296
        %v330 = vmul.f32 %v250, %v296
        %v331 = vmul.f32 %v251, %v301
        %v332 = vmul.f32 %v252, %v301
        %v333 = vmul.f32 %v253, %v301
        %v334 = vmul.f32 %v254, %v301
        %v335 = vpack.c.bf16 %v304, %v303
        %v336 = vpack.c.bf16 %v306, %v305
        %v337 = vpack.c.bf16 %v308, %v307
        %v338 = vpack.c.bf16 %v310, %v309
        %v339 = vpack.c.bf16 %v312, %v311
        %v340 = vpack.c.bf16 %v314, %v313
        %v341 = vpack.c.bf16 %v316, %v315
        %v342 = vpack.c.bf16 %v318, %v317
        %v343 = vpack.c.bf16 %v320, %v319
        %v344 = vpack.c.bf16 %v322, %v321
        %v345 = vpack.c.bf16 %v324, %v323
        %v346 = vpack.c.bf16 %v326, %v325
        %v347 = vpack.c.bf16 %v328, %v327
        %v348 = vpack.c.bf16 %v330, %v329
        %v349 = vpack.c.bf16 %v332, %v331
        %v350 = vpack.c.bf16 %v334, %v333
        %351 = vst [vmem:[%s191] sm:$0xff] %v335
        %352 = vst [vmem:[%s191 + $0x8] sm:$0xff] %v336
        %353 = vst [vmem:[%s191 + $0x10] sm:$0xff] %v337
        %354 = vst [vmem:[%s191 + $0x18] sm:$0xff] %v338
        %355 = vst [vmem:[%s191 + $0x20] sm:$0xff] %v339
        %356 = vst [vmem:[%s191 + $0x28] sm:$0xff] %v340
        %357 = vst [vmem:[%s191 + $0x30] sm:$0xff] %v341
        %358 = vst [vmem:[%s191 + $0x38] sm:$0xff] %v342
        %359 = vst [vmem:[%s191 + $0x40] sm:$0xff] %v343
        %360 = vst [vmem:[%s191 + $0x48] sm:$0xff] %v344
        %361 = vst [vmem:[%s191 + $0x50] sm:$0xff] %v345
        %362 = vst [vmem:[%s191 + $0x58] sm:$0xff] %v346
        %363 = vst [vmem:[%s191 + $0x60] sm:$0xff] %v347
        %364 = vst [vmem:[%s191 + $0x68] sm:$0xff] %v348
        %365 = vst [vmem:[%s191 + $0x70] sm:$0xff] %v349
        %366 = vst [vmem:[%s191 + $0x78] sm:$0xff] %v350
        %v367 = vadd.f32 %v303, %v307
        %v368 = vadd.f32 %v367, %v311
        %v369 = vadd.f32 %v368, %v315
        %v370 = vadd.f32 %v369, %v319
        %v371 = vadd.f32 %v370, %v323
        %v372 = vadd.f32 %v371, %v327
        %v373 = vadd.f32 %v372, %v331
        %v374 = vadd.f32 %v304, %v308
        %v375 = vadd.f32 %v374, %v312
        %v376 = vadd.f32 %v375, %v316
        %v377 = vadd.f32 %v376, %v320
        %v378 = vadd.f32 %v377, %v324
        %v379 = vadd.f32 %v378, %v328
        %v380 = vadd.f32 %v379, %v332
        %v381 = vadd.f32 %v305, %v309
        %v382 = vadd.f32 %v381, %v313
        %v383 = vadd.f32 %v382, %v317
        %v384 = vadd.f32 %v383, %v321
        %v385 = vadd.f32 %v384, %v325
        %v386 = vadd.f32 %v385, %v329
        %v387 = vadd.f32 %v386, %v333
        %v388 = vadd.f32 %v306, %v310
        %v389 = vadd.f32 %v388, %v314
        %v390 = vadd.f32 %v389, %v318
        %v391 = vadd.f32 %v390, %v322
        %v392 = vadd.f32 %v391, %v326
        %v393 = vadd.f32 %v392, %v330
        %v394 = vadd.f32 %v393, %v334
        %v395 = vrot.slane %v303, 4
        %v396 = vadd.f32 %v303, %v395
        %v397 = vrot.slane %v396, 2
        %v398 = vadd.f32 %v396, %v397
        %v399 = vrot.slane %v398, 1
        %v400 = vadd.f32 %v398, %v399
        %v401 = vrot.slane %v304, 4
        %v402 = vadd.f32 %v304, %v401
        %v403 = vrot.slane %v402, 2
        %v404 = vadd.f32 %v402, %v403
        %v405 = vrot.slane %v404, 1
        %v406 = vadd.f32 %v404, %v405
        %v407 = vrot.slane %v305, 4
        %v408 = vadd.f32 %v305, %v407
        %v409 = vrot.slane %v408, 2
        %v410 = vadd.f32 %v408, %v409
        %v411 = vrot.slane %v410, 1
        %v412 = vadd.f32 %v410, %v411
        %v413 = vrot.slane %v306, 4
        %v414 = vadd.f32 %v306, %v413
        %v415 = vrot.slane %v414, 2
        %v416 = vadd.f32 %v414, %v415
        %v417 = vrot.slane %v416, 1
        %v418 = vadd.f32 %v416, %v417
        %v419 = vrot.slane %v307, 4
        %v420 = vadd.f32 %v307, %v419
        %v421 = vrot.slane %v420, 2
        %v422 = vadd.f32 %v420, %v421
        %v423 = vrot.slane %v422, 1
        %v424 = vadd.f32 %v422, %v423
        %v425 = vrot.slane %v308, 4
        %v426 = vadd.f32 %v308, %v425
        %v427 = vrot.slane %v426, 2
        %v428 = vadd.f32 %v426, %v427
        %v429 = vrot.slane %v428, 1
        %v430 = vadd.f32 %v428, %v429
        %v431 = vrot.slane %v309, 4
        %v432 = vadd.f32 %v309, %v431
        %v433 = vrot.slane %v432, 2
        %v434 = vadd.f32 %v432, %v433
        %v435 = vrot.slane %v434, 1
        %v436 = vadd.f32 %v434, %v435
        %v437 = vrot.slane %v310, 4
        %v438 = vadd.f32 %v310, %v437
        %v439 = vrot.slane %v438, 2
        %v440 = vadd.f32 %v438, %v439
        %v441 = vrot.slane %v440, 1
        %v442 = vadd.f32 %v440, %v441
        %v443 = vrot.slane %v311, 4
        %v444 = vadd.f32 %v311, %v443
        %v445 = vrot.slane %v444, 2
        %v446 = vadd.f32 %v444, %v445
        %v447 = vrot.slane %v446, 1
        %v448 = vadd.f32 %v446, %v447
        %v449 = vrot.slane %v312, 4
        %v450 = vadd.f32 %v312, %v449
        %v451 = vrot.slane %v450, 2
        %v452 = vadd.f32 %v450, %v451
        %v453 = vrot.slane %v452, 1
        %v454 = vadd.f32 %v452, %v453
        %v455 = vrot.slane %v313, 4
        %v456 = vadd.f32 %v313, %v455
        %v457 = vrot.slane %v456, 2
        %v458 = vadd.f32 %v456, %v457
        %v459 = vrot.slane %v458, 1
        %v460 = vadd.f32 %v458, %v459
        %v461 = vrot.slane %v314, 4
        %v462 = vadd.f32 %v314, %v461
        %v463 = vrot.slane %v462, 2
        %v464 = vadd.f32 %v462, %v463
        %v465 = vrot.slane %v464, 1
        %v466 = vadd.f32 %v464, %v465
        %v467 = vrot.slane %v315, 4
        %v468 = vadd.f32 %v315, %v467
        %v469 = vrot.slane %v468, 2
        %v470 = vadd.f32 %v468, %v469
        %v471 = vrot.slane %v470, 1
        %v472 = vadd.f32 %v470, %v471
        %v473 = vrot.slane %v316, 4
        %v474 = vadd.f32 %v316, %v473
        %v475 = vrot.slane %v474, 2
        %v476 = vadd.f32 %v474, %v475
        %v477 = vrot.slane %v476, 1
        %v478 = vadd.f32 %v476, %v477
        %v479 = vrot.slane %v317, 4
        %v480 = vadd.f32 %v317, %v479
        %v481 = vrot.slane %v480, 2
        %v482 = vadd.f32 %v480, %v481
        %v483 = vrot.slane %v482, 1
        %v484 = vadd.f32 %v482, %v483
        %v485 = vrot.slane %v318, 4
        %v486 = vadd.f32 %v318, %v485
        %v487 = vrot.slane %v486, 2
        %v488 = vadd.f32 %v486, %v487
        %v489 = vrot.slane %v488, 1
        %v490 = vadd.f32 %v488, %v489
        %v491 = vrot.slane %v319, 4
        %v492 = vadd.f32 %v319, %v491
        %v493 = vrot.slane %v492, 2
        %v494 = vadd.f32 %v492, %v493
        %v495 = vrot.slane %v494, 1
        %v496 = vadd.f32 %v494, %v495
        %v497 = vrot.slane %v320, 4
        %v498 = vadd.f32 %v320, %v497
        %v499 = vrot.slane %v498, 2
        %v500 = vadd.f32 %v498, %v499
        %v501 = vrot.slane %v500, 1
        %v502 = vadd.f32 %v500, %v501
        %v503 = vrot.slane %v321, 4
        %v504 = vadd.f32 %v321, %v503
        %v505 = vrot.slane %v504, 2
        %v506 = vadd.f32 %v504, %v505
        %v507 = vrot.slane %v506, 1
        %v508 = vadd.f32 %v506, %v507
        %v509 = vrot.slane %v322, 4
        %v510 = vadd.f32 %v322, %v509
        %v511 = vrot.slane %v510, 2
        %v512 = vadd.f32 %v510, %v511
        %v513 = vrot.slane %v512, 1
        %v514 = vadd.f32 %v512, %v513
        %v515 = vrot.slane %v323, 4
        %v516 = vadd.f32 %v323, %v515
        %v517 = vrot.slane %v516, 2
        %v518 = vadd.f32 %v516, %v517
        %v519 = vrot.slane %v518, 1
        %v520 = vadd.f32 %v518, %v519
        %v521 = vrot.slane %v324, 4
        %v522 = vadd.f32 %v324, %v521
        %v523 = vrot.slane %v522, 2
        %v524 = vadd.f32 %v522, %v523
        %v525 = vrot.slane %v524, 1
        %v526 = vadd.f32 %v524, %v525
        %v527 = vrot.slane %v325, 4
        %v528 = vadd.f32 %v325, %v527
        %v529 = vrot.slane %v528, 2
        %v530 = vadd.f32 %v528, %v529
        %v531 = vrot.slane %v530, 1
        %v532 = vadd.f32 %v530, %v531
        %v533 = vrot.slane %v326, 4
        %v534 = vadd.f32 %v326, %v533
        %v535 = vrot.slane %v534, 2
        %v536 = vadd.f32 %v534, %v535
        %v537 = vrot.slane %v536, 1
        %v538 = vadd.f32 %v536, %v537
        %v539 = vrot.slane %v327, 4
        %v540 = vadd.f32 %v327, %v539
        %v541 = vrot.slane %v540, 2
        %v542 = vadd.f32 %v540, %v541
        %v543 = vrot.slane %v542, 1
        %v544 = vadd.f32 %v542, %v543
        %v545 = vrot.slane %v328, 4
        %v546 = vadd.f32 %v328, %v545
        %v547 = vrot.slane %v546, 2
        %v548 = vadd.f32 %v546, %v547
        %v549 = vrot.slane %v548, 1
        %v550 = vadd.f32 %v548, %v549
        %v551 = vrot.slane %v329, 4
        %v552 = vadd.f32 %v329, %v551
        %v553 = vrot.slane %v552, 2
        %v554 = vadd.f32 %v552, %v553
        %v555 = vrot.slane %v554, 1
        %v556 = vadd.f32 %v554, %v555
        %v557 = vrot.slane %v330, 4
        %v558 = vadd.f32 %v330, %v557
        %v559 = vrot.slane %v558, 2
        %v560 = vadd.f32 %v558, %v559
        %v561 = vrot.slane %v560, 1
        %v562 = vadd.f32 %v560, %v561
        %v563 = vrot.slane %v331, 4
        %v564 = vadd.f32 %v331, %v563
        %v565 = vrot.slane %v564, 2
        %v566 = vadd.f32 %v564, %v565
        %v567 = vrot.slane %v566, 1
        %v568 = vadd.f32 %v566, %v567
        %v569 = vrot.slane %v332, 4
        %v570 = vadd.f32 %v332, %v569
        %v571 = vrot.slane %v570, 2
        %v572 = vadd.f32 %v570, %v571
        %v573 = vrot.slane %v572, 1
        %v574 = vadd.f32 %v572, %v573
        %v575 = vrot.slane %v333, 4
        %v576 = vadd.f32 %v333, %v575
        %v577 = vrot.slane %v576, 2
        %v578 = vadd.f32 %v576, %v577
        %v579 = vrot.slane %v578, 1
        %v580 = vadd.f32 %v578, %v579
        %v581 = vrot.slane %v334, 4
        %v582 = vadd.f32 %v334, %v581
        %v583 = vrot.slane %v582, 2
        %v584 = vadd.f32 %v582, %v583
        %v585 = vrot.slane %v584, 1
        %v586 = vadd.f32 %v584, %v585
        %v587 = vrot.slane %v373, 4
        %v588 = vadd.f32 %v373, %v587
        %v589 = vrot.slane %v588, 2
        %v590 = vadd.f32 %v588, %v589
        %v591 = vrot.slane %v590, 1
        %v592 = vadd.f32 %v590, %v591
        %v593 = vrot.slane %v380, 4
        %v594 = vadd.f32 %v380, %v593
        %v595 = vrot.slane %v594, 2
        %v596 = vadd.f32 %v594, %v595
        %v597 = vrot.slane %v596, 1
        %v598 = vadd.f32 %v596, %v597
        %v599 = vrot.slane %v387, 4
        %v600 = vadd.f32 %v387, %v599
        %v601 = vrot.slane %v600, 2
        %v602 = vadd.f32 %v600, %v601
        %v603 = vrot.slane %v602, 1
        %v604 = vadd.f32 %v602, %v603
        %v605 = vrot.slane %v394, 4
        %v606 = vadd.f32 %v394, %v605
        %v607 = vrot.slane %v606, 2
        %v608 = vadd.f32 %v606, %v607
        %v609 = vrot.slane %v608, 1
        %v610 = vadd.f32 %v608, %v609
        %v611 = vlaneseq
        %v612 = vshrl.u32 %v611, 7
        %vm613 = vcmp.eq.s32.totalorder %v612, 0
        %vm614 = vcmp.gt.f32.partialorder %v373, 0.0
        %vm615 = vcmp.gt.f32.partialorder %v380, 0.0
        %vm616 = vcmp.gt.f32.partialorder %v387, 0.0
        %vm617 = vcmp.gt.f32.partialorder %v394, 0.0
        %vm618 = vmor %vm613, %vm614
        %vm619 = vmor %vm613, %vm615
        %vm620 = vmor %vm613, %vm616
        %vm621 = vmor %vm613, %vm617
        %v622 = vsel %vm618, 1.0, 0.0
        %v623 = vsel %vm619, 1.0, 0.0
        %v624 = vsel %vm620, 1.0, 0.0
        %v625 = vsel %vm621, 1.0, 0.0
        %vm626 = vcmp.eq.s32.totalorder %v612, 7
        %vm627 = vcmp.gt.f32.partialorder %v400, 0.0
        %vm628 = vcmp.gt.f32.partialorder %v406, 0.0
        %vm629 = vcmp.gt.f32.partialorder %v412, 0.0
        %vm630 = vcmp.gt.f32.partialorder %v418, 0.0
        %vm631 = vcmp.gt.f32.partialorder %v424, 0.0
        %vm632 = vcmp.gt.f32.partialorder %v430, 0.0
        %vm633 = vcmp.gt.f32.partialorder %v436, 0.0
        %vm634 = vcmp.gt.f32.partialorder %v442, 0.0
        %vm635 = vcmp.gt.f32.partialorder %v448, 0.0
        %vm636 = vcmp.gt.f32.partialorder %v454, 0.0
        %vm637 = vcmp.gt.f32.partialorder %v460, 0.0
        %vm638 = vcmp.gt.f32.partialorder %v466, 0.0
        %vm639 = vcmp.gt.f32.partialorder %v472, 0.0
        %vm640 = vcmp.gt.f32.partialorder %v478, 0.0
        %vm641 = vcmp.gt.f32.partialorder %v484, 0.0
        %vm642 = vcmp.gt.f32.partialorder %v490, 0.0
        %vm643 = vcmp.gt.f32.partialorder %v496, 0.0
        %vm644 = vcmp.gt.f32.partialorder %v502, 0.0
        %vm645 = vcmp.gt.f32.partialorder %v508, 0.0
        %vm646 = vcmp.gt.f32.partialorder %v514, 0.0
        %vm647 = vcmp.gt.f32.partialorder %v520, 0.0
        %vm648 = vcmp.gt.f32.partialorder %v526, 0.0
        %vm649 = vcmp.gt.f32.partialorder %v532, 0.0
        %vm650 = vcmp.gt.f32.partialorder %v538, 0.0
        %vm651 = vcmp.gt.f32.partialorder %v544, 0.0
        %vm652 = vcmp.gt.f32.partialorder %v550, 0.0
        %vm653 = vcmp.gt.f32.partialorder %v556, 0.0
        %vm654 = vcmp.gt.f32.partialorder %v562, 0.0
        %vm655 = vcmp.gt.f32.partialorder %v568, 0.0
        %vm656 = vcmp.gt.f32.partialorder %v574, 0.0
        %vm657 = vcmp.gt.f32.partialorder %v580, 0.0
        %vm658 = vcmp.gt.f32.partialorder %v586, 0.0
        %v659 = vsel %vm627, 1, 0
        %v660 = vsel %vm628, 1, 0
        %v661 = vsel %vm629, 1, 0
        %v662 = vsel %vm630, 1, 0
        %v663 = vsel %vm631, 1, 0
        %v664 = vsel %vm632, 1, 0
        %v665 = vsel %vm633, 1, 0
        %v666 = vsel %vm634, 1, 0
        %v667 = vsel %vm635, 1, 0
        %v668 = vsel %vm636, 1, 0
        %v669 = vsel %vm637, 1, 0
        %v670 = vsel %vm638, 1, 0
        %v671 = vsel %vm639, 1, 0
        %v672 = vsel %vm640, 1, 0
        %v673 = vsel %vm641, 1, 0
        %v674 = vsel %vm642, 1, 0
        %v675 = vsel %vm643, 1, 0
        %v676 = vsel %vm644, 1, 0
        %v677 = vsel %vm645, 1, 0
        %v678 = vsel %vm646, 1, 0
        %v679 = vsel %vm647, 1, 0
        %v680 = vsel %vm648, 1, 0
        %v681 = vsel %vm649, 1, 0
        %v682 = vsel %vm650, 1, 0
        %v683 = vsel %vm651, 1, 0
        %v684 = vsel %vm652, 1, 0
        %v685 = vsel %vm653, 1, 0
        %v686 = vsel %vm654, 1, 0
        %v687 = vsel %vm655, 1, 0
        %v688 = vsel %vm656, 1, 0
        %v689 = vsel %vm657, 1, 0
        %v690 = vsel %vm658, 1, 0
        %vm691 = vcmask 1041409
        %v692 = vsel %vm691, %v663, %v659
        %vm693 = vcmask 1042434
        %v694 = vsel %vm693, %v667, %v692
        %vm695 = vcmask 1043459
        %v696 = vsel %vm695, %v671, %v694
        %vm697 = vcmask 1044484
        %v698 = vsel %vm697, %v675, %v696
        %vm699 = vcmask 1045509
        %v700 = vsel %vm699, %v679, %v698
        %vm701 = vcmask 1046534
        %v702 = vsel %vm701, %v683, %v700
        %vm703 = vcmask 1047559
        %v704 = vsel %vm703, %v687, %v702
        %v705 = vsel %vm691, %v664, %v660
        %v706 = vsel %vm693, %v668, %v705
        %v707 = vsel %vm695, %v672, %v706
        %v708 = vsel %vm697, %v676, %v707
        %v709 = vsel %vm699, %v680, %v708
        %v710 = vsel %vm701, %v684, %v709
        %v711 = vsel %vm703, %v688, %v710
        %v712 = vsel %vm691, %v665, %v661
        %v713 = vsel %vm693, %v669, %v712
        %v714 = vsel %vm695, %v673, %v713
        %v715 = vsel %vm697, %v677, %v714
        %v716 = vsel %vm699, %v681, %v715
        %v717 = vsel %vm701, %v685, %v716
        %v718 = vsel %vm703, %v689, %v717
        %v719 = vsel %vm691, %v666, %v662
        %v720 = vsel %vm693, %v670, %v719
        %v721 = vsel %vm695, %v674, %v720
        %v722 = vsel %vm697, %v678, %v721
        %v723 = vsel %vm699, %v682, %v722
        %v724 = vsel %vm701, %v686, %v723
        %v725 = vsel %vm703, %v690, %v724
        %vm726 = vcmp.ne.s32.totalorder %v704, 0
        %vm727 = vcmp.ne.s32.totalorder %v711, 0
        %vm728 = vcmp.ne.s32.totalorder %v718, 0
        %vm729 = vcmp.ne.s32.totalorder %v725, 0
        %vm730 = vmor %vm626, %vm726
        %vm731 = vmor %vm626, %vm727
        %vm732 = vmor %vm626, %vm728
        %vm733 = vmor %vm626, %vm729
        %v734 = vsel %vm730, 1.0, 0.0
        %v735 = vsel %vm731, 1.0, 0.0
        %v736 = vsel %vm732, 1.0, 0.0
        %v737 = vsel %vm733, 1.0, 0.0
        %v738 = vmul.f32 %v622, %v734
        %v739 = vmul.f32 %v623, %v735
        %v740 = vmul.f32 %v624, %v736
        %v741 = vmul.f32 %v625, %v737
        %v742 = vrot.slane %v738, 4
        %v743 = vmin.f32 %v738, %v742
        %v744 = vrot.slane %v743, 2
        %v745 = vmin.f32 %v743, %v744
        %v746 = vrot.slane %v745, 1
        %v747 = vmin.f32 %v745, %v746
        %v748 = vrot.slane %v739, 4
        %v749 = vmin.f32 %v739, %v748
        %v750 = vrot.slane %v749, 2
        %v751 = vmin.f32 %v749, %v750
        %v752 = vrot.slane %v751, 1
        %v753 = vmin.f32 %v751, %v752
        %v754 = vrot.slane %v740, 4
        %v755 = vmin.f32 %v740, %v754
        %v756 = vrot.slane %v755, 2
        %v757 = vmin.f32 %v755, %v756
        %v758 = vrot.slane %v757, 1
        %v759 = vmin.f32 %v757, %v758
        %v760 = vrot.slane %v741, 4
        %v761 = vmin.f32 %v741, %v760
        %v762 = vrot.slane %v761, 2
        %v763 = vmin.f32 %v761, %v762
        %v764 = vrot.slane %v763, 1
        %v765 = vmin.f32 %v763, %v764
        %vm766 = vcmask 1040384
        %v767 = vsel %vm766, %v592, %v747
        %v768 = vsel %vm766, %v598, %v753
        %v769 = vsel %vm766, %v604, %v759
        %v770 = vsel %vm766, %v610, %v765
        %v775 = vrot.slane %v768, 6
        %v776 = vrot.slane %v769, 4
        %v777 = vrot.slane %v770, 2
        %vm778 = vcmask 1041408
        %v779 = vsel %vm778, %v767, %v775
        %vm780 = vcmask 1045508
        %v781 = vsel %vm780, %v776, %v777
        %vm782 = vcmask 1043456
        %v783 = vsel %vm782, %v779, %v781
        %785 = vst [vmem:[%s205] sm:$0xff] %v783
        %s786 = sand.u32 %s76, 1
        %s787 = scalar_lea.sflag [#allocation4], %s786
        %s788 = sand.u32 %s76, 1
        %s789 = smul.addr %s788, 128
        %s790 = scalar_lea.vmem [#allocation5], %s789
        %s791 = smul.u32 4, %s21
        %p792 = scmp.lt.s32.totalorder %s791, 7
        %s793 = scalar_select %p792, %s791, 7
        %s794 = smul.addr %s793, 2
        %s795 = scalar_lea.vmem %s3, %s794
        // Predicated region
        $region33: #{sampling_arch_metrics.1} parent=27 // pred_check
          %p796 = pneg %p86
        $region34: #{sampling_arch_metrics.1} parent=27 // pred_check_branch
          %798 = sbr.rel (%p796) target = $region36
        $region35: #{sampling_arch_metrics.1} parent=27 // pred_region
          %s799 = smul.u32 4, %s21
          %801 = vsyncadd %s787, 0
          %s802 = smul.addr %s799, 4
          %s803 = scalar_lea.hbm %s2, %s802
          %s804 = sshll.u32 %s790, 4
          %s805 = int_to_ptr.vmem [resolvable:$true] %s804
          %s806 = sshll.u32 %s803, 4
          %s807 = int_to_ptr.hbm [resolvable:$true] %s806
          %812 = dma.vmem_to_hbm [thread:$0]  %s805, 2048, %s807, %s787, 256, 512, 16
        $region36: #{sampling_arch_metrics.1} parent=27 // pred_fallthru
          _
        // Predicated region
        $region37: #{sampling_arch_metrics.1} parent=27 // pred_check
          %p813 = pneg %p112
        $region38: #{sampling_arch_metrics.1} parent=27 // pred_check_branch
          %815 = sbr.rel (%p813) target = $region40
        $region39: #{sampling_arch_metrics.1} parent=27 // pred_region
          %s816 = smul.u32 4, %s21
        $region40: #{sampling_arch_metrics.1} parent=27 // pred_fallthru
          _
      $region28: #{sampling_arch_metrics.1} parent=5 // pred_fallthru
        _
      %p817 = scmp.le.s32.totalorder 2, %s16
      // Predicated region
      $region41: #{sampling_arch_metrics.1} parent=5 // pred_check
        %p818 = pneg %p817
      $region42: #{sampling_arch_metrics.1} parent=5 // pred_check_branch
        %820 = sbr.rel (%p818) target = $region44
      $region43: #{sampling_arch_metrics.1} parent=5 // pred_region
        %s821 = ssub.s32 %s16, 2
        // Predicated region
        $region45: #{sampling_arch_metrics.1} parent=43 // pred_check
          %p822 = pneg %p92
        $region46: #{sampling_arch_metrics.1} parent=43 // pred_check_branch
          %824 = sbr.rel (%p822) target = $region48
        $region47: #{sampling_arch_metrics.1} parent=43 // pred_region
          %s825 = sand.u32 %s77, 1
          %s826 = scalar_lea.sflag [#allocation4], %s825
          %s827 = sand.u32 %s77, 1
          %s828 = smul.addr %s827, 128
          %s829 = scalar_lea.vmem [#allocation5], %s828
          %831 = dma.done %s826, 2048
        $region48: #{sampling_arch_metrics.1} parent=43 // pred_fallthru
          _
        // Predicated region
        $region49: #{sampling_arch_metrics.1} parent=43 // pred_check
          %p832 = pneg %p118
        $region50: #{sampling_arch_metrics.1} parent=43 // pred_check_branch
          %834 = sbr.rel (%p832) target = $region52
        $region51: #{sampling_arch_metrics.1} parent=43 // pred_region
          %s835 = smul.u32 4, %s22
          %p836 = scmp.lt.s32.totalorder %s835, 7
          %s837 = scalar_select %p836, %s835, 7
          %s838 = smul.addr %s837, 2
          %s839 = scalar_lea.vmem %s3, %s838
        $region52: #{sampling_arch_metrics.1} parent=43 // pred_fallthru
          _
      $region44: #{sampling_arch_metrics.1} parent=5 // pred_fallthru
        _
    $region6: #{sampling_arch_metrics.1} parent=1 // loop_footer
      %s20 = sadd.s32 1, %s16
    $region7: #{sampling_arch_metrics.1} parent=1 // loop_footer_branch
      %15 = sbr.rel target = $region3
    $region8: #{sampling_arch_metrics.1} parent=1 // loop_exit
      _
    %840 = vsyncpa [#allocation3], 1
    %s841 = scalar_lea.sflag [#allocation3], 1
    %842 = vsyncpa %s841, 1
    %843 = vsyncpa [#allocation4], 1
    %s844 = scalar_lea.sflag [#allocation4], 1
    %845 = vsyncpa %s844, 1

</llo_original>
